<compile_context>
chip_gen: v7x
topology: tpu7x:2x2x1
jax: 0.10.0
libtpu: 0.0.40
codegen_flags: <defaults>
</compile_context>

<pallas_src>
import functools

import jax
import jax.numpy as jnp
from jax import lax
from jax.experimental import pallas as pl
from jax.experimental.pallas import tpu as pltpu

LANE = 128
MAX_TILE_ROWS = 8192          # (8192,128) f32 = 4 MiB/block; 2 inputs x 2 buffers = 16 MiB
ROW_ALIGN = 64                # block rows multiple of 64: f32/bf16/int8 packing + strips
STRIP_ROWS = 64               # inner-loop strip (8 vregs per value -> no spills)
NUM_CORE_SPLITS = 2           # leading "parallel" axis (v7x: 2 TCs). Serial elsewhere.
VMEM_LIMIT_BYTES = 32 * 1024 * 1024


def _cdiv(a, b):
    return -(-a // b)


def _round_up(v, m):
    return _cdiv(v, m) * m


def _reduce_rows_to8(v, rows):
    """(rows, 128) f32 -> (8, 128) partial sums using tile-aligned VPU adds.

    A ragged tail (rows % 8) is sublane-reduced and folded into sublane 0; that path
    is only emitted for tiny single-block inputs.
    """
    g = rows // 8
    if g > 1:
        acc8 = v[: g * 8].reshape(g, 8, LANE).sum(axis=0)
    elif g == 1:
        acc8 = v[:8]
    else:
        acc8 = jnp.zeros((8, LANE), jnp.float32)
    r = rows - g * 8
    if r:
        tail = v[g * 8:].sum(axis=0, keepdims=True)          # (1, LANE)
        row8 = lax.broadcasted_iota(jnp.int32, (8, LANE), 0)
        acc8 = acc8 + jnp.where(row8 == 0, tail, 0.0)
    return acc8


def _dice_bce_kernel(x_ref, t_ref, out_ref, acc_ref, *, tile_rows, strip_rows,
                     blocks_per_core, full_rows, rem, need_mask):
    """Accumulate [sum(s*t), sum(s), sum(t), sum(softplus(-s))] per core.

    acc_ref : VMEM (4, 8, 128) f32 per-core vector accumulator.
    out_ref : SMEM (1, 4) f32 partial sums for this core (written on last step).
    """
    c = pl.program_id(0)
    i = pl.program_id(1)
    steps = pl.num_programs(1)

    @pl.when(i == 0)
    def _():
        acc_ref[...] = jnp.zeros_like(acc_ref)

    n_strips = tile_rows // strip_rows
    block_row0 = (c * blocks_per_core + i) * tile_rows   # intended (unclamped) first row

    def run(masked):
        if masked:
            # One reusable (strip_rows, 128) iota pair, hoisted out of the strip loop.
            row_iota = lax.broadcasted_iota(jnp.int32, (strip_rows, LANE), 0)
            col_iota = lax.broadcasted_iota(jnp.int32, (strip_rows, LANE), 1)

        def strip(sidx, carry):
            a_st, a_s, a_t, a_sp = carry
            r0 = sidx * strip_rows
            if not isinstance(r0, int):
                r0 = pl.multiple_of(r0, strip_rows)
            x = x_ref[pl.ds(r0, strip_rows), :].astype(jnp.float32)
            t = t_ref[pl.ds(r0, strip_rows), :].astype(jnp.float32)
            # sigmoid with a single EUP transcendental.
            s = 0.5 * jnp.tanh(0.5 * x) + 0.5
            # softplus(-s) = log1p(exp(-s)); exact BCE term since s in (0,1).
            sp = jnp.log1p(jnp.exp(-s))
            st = s * t
            if masked:
                # Row-level compare (no element-index int32 overflow).
                grow = block_row0 + r0 + row_iota
                valid = grow < full_rows
                if rem:
                    valid = valid | ((grow == full_rows) & (col_iota < rem))
                s = jnp.where(valid, s, 0.0)
                t = jnp.where(valid, t, 0.0)
                st = jnp.where(valid, st, 0.0)
                sp = jnp.where(valid, sp, 0.0)
            return (a_st + _reduce_rows_to8(st, strip_rows),
                    a_s + _reduce_rows_to8(s, strip_rows),
                    a_t + _reduce_rows_to8(t, strip_rows),
                    a_sp + _reduce_rows_to8(sp, strip_rows))

        zero = jnp.zeros((8, LANE), jnp.float32)
        init = (zero, zero, zero, zero)
        if n_strips == 1:
            a_st, a_s, a_t, a_sp = strip(0, init)
        else:
            a_st, a_s, a_t, a_sp = lax.fori_loop(0, n_strips, strip, init)
        acc_ref[0] += a_st
        acc_ref[1] += a_s
        acc_ref[2] += a_t
        acc_ref[3] += a_sp

    if need_mask:
        fully_valid = block_row0 + tile_rows <= full_rows

        @pl.when(fully_valid)
        def _():
            run(False)

        @pl.when(jnp.logical_not(fully_valid))
        def _():
            run(True)
    else:
        run(False)

    @pl.when(i == steps - 1)
    def _():
        out_ref[0, 0] = jnp.sum(acc_ref[0])
        out_ref[0, 1] = jnp.sum(acc_ref[1])
        out_ref[0, 2] = jnp.sum(acc_ref[2])
        out_ref[0, 3] = jnp.sum(acc_ref[3])


@functools.partial(jax.jit, static_argnames=("alpha", "smooth"))
def dice_bce_loss(inputs, targets, alpha=0.4, smooth=1e-8):
    """Pallas TPU implementation of DiceBCELoss.forward."""
    n = int(inputs.size)
    full_rows, rem = divmod(n, LANE)
    rows = full_rows + (1 if rem else 0)

    x = inputs.reshape(-1)
    t = targets.reshape(-1)
    if rem:
        # Lane-alignment pad (< 128 elements) — only when n % 128 != 0. Block-multiple
        # padding is gone; ragged blocks are masked in-kernel instead.
        pad = LANE - rem
        x = jnp.pad(x, (0, pad))
        t = jnp.pad(t, (0, pad))
    x2 = x.reshape(rows, LANE)
    t2 = t.reshape(rows, LANE)

    # ---- tiling ---------------------------------------------------------------
    tile_rows = min(MAX_TILE_ROWS, _round_up(_cdiv(rows, NUM_CORE_SPLITS), ROW_ALIGN))
    if tile_rows >= rows:
        tile_rows = rows                      # single full-extent block (always legal)
    total_blocks = _cdiv(rows, tile_rows)
    # NOTE: 2-way split targets v7x's 2 TensorCores; on 1-TC chips it's a serial loop.
    ncores = min(NUM_CORE_SPLITS, total_blocks)
    blocks_per_core = _cdiv(total_blocks, ncores)
    strip_rows = STRIP_ROWS if tile_rows % STRIP_ROWS == 0 else tile_rows

    # Masking only if some block can see rows past the real data.
    need_mask = (rem != 0) or (rows % tile_rows != 0) or (
        ncores * blocks_per_core != total_blocks)

    last_block = total_blocks - 1
    in_spec = pl.BlockSpec(
        (tile_rows, LANE),
        # Clamp so a duplicated trailing block (odd split) re-reads in-bounds data;
        # its contribution is masked to zero in-kernel.
        lambda c, i: (jnp.minimum(c * blocks_per_core + i, last_block), 0),
    )

    kernel = functools.partial(
        _dice_bce_kernel,
        tile_rows=int(tile_rows),
        strip_rows=int(strip_rows),
        blocks_per_core=int(blocks_per_core),
        full_rows=int(full_rows),
        rem=int(rem),
        need_mask=bool(need_mask),
    )

    bytes_accessed = (x2.size * x2.dtype.itemsize
                      + t2.size * t2.dtype.itemsize + ncores * 4 * 4)

    parts = pl.pallas_call(
        kernel,
        out_shape=jax.ShapeDtypeStruct((ncores, 4), jnp.float32),
        grid=(ncores, blocks_per_core),
        in_specs=[in_spec, in_spec],
        out_specs=pl.BlockSpec((1, 4), lambda c, i: (c, 0), memory_space=pltpu.SMEM),
        scratch_shapes=[pltpu.VMEM((4, 8, LANE), jnp.float32)],
        compiler_params=pltpu.CompilerParams(
            dimension_semantics=("parallel", "arbitrary"),
            vmem_limit_bytes=VMEM_LIMIT_BYTES,
        ),
        cost_estimate=pl.CostEstimate(
            flops=12 * n, transcendentals=3 * n, bytes_accessed=int(bytes_accessed)),
    )(x2, t2)

    # Tiny cross-core combine + final scalar math.
    sums = jnp.sum(parts, axis=0)
    inter, sum_s, sum_t, sum_sp = sums[0], sums[1], sums[2], sums[3]
    dice_loss = 1.0 - (2.0 * inter + smooth) / (sum_s + sum_t + smooth)
    # BCEWithLogits applied to z = sigmoid(x) in (0,1): z - z*t + log1p(exp(-z)).
    bce_mean = (sum_s - inter + sum_sp) / n
    return (1.0 - alpha) * bce_mean + alpha * dice_loss


def _dice_bce_ref(inputs, targets, alpha=0.4, smooth=1e-8):
    """Pure-JAX reference mirroring the PyTorch module exactly."""
    s = jax.nn.sigmoid(inputs.astype(jnp.float32)).reshape(-1)
    t = targets.astype(jnp.float32).reshape(-1)
    inter = jnp.sum(s * t)
    dice = 1.0 - (2.0 * inter + smooth) / (jnp.sum(s) + jnp.sum(t) + smooth)
    z = s  # BCEWithLogits applied to the sigmoided values, as in the module
    bce = jnp.mean(jnp.maximum(z, 0.0) - z * t + jnp.log1p(jnp.exp(-jnp.abs(z))))
    return (1.0 - alpha) * bce + alpha * dice


if __name__ == "__main__":
    key = jax.random.PRNGKey(0)
    k1, k2 = jax.random.split(key)

    # Small NCHW shapes consistent with a segmentation logit map (lane-aligned, no pad).
    x = jax.random.normal(k1, (2, 4, 16, 16), dtype=jnp.float32)
    tgt = jax.random.bernoulli(k2, p=0.5, shape=(2, 4, 16, 16)).astype(jnp.float32)
    loss = dice_bce_loss(x, tgt)
    jax.block_until_ready(loss)
    ref = _dice_bce_ref(x, tgt)
    assert jnp.allclose(loss, ref, atol=1e-5, rtol=1e-5), (loss, ref)

    # Odd total size (n % 128 != 0): lane pad + in-kernel lane/row masking.
    k3, k4 = jax.random.split(k2)
    x_odd = jax.random.normal(k3, (3, 5, 17, 13), dtype=jnp.float32)
    t_odd = jax.random.bernoulli(k4, p=0.3, shape=(3, 5, 17, 13)).astype(jnp.float32)
    loss_odd = dice_bce_loss(x_odd, t_odd)
    jax.block_until_ready(loss_odd)
    ref_odd = _dice_bce_ref(x_odd, t_odd)
    assert jnp.allclose(loss_odd, ref_odd, atol=1e-5, rtol=1e-5), (loss_odd, ref_odd)

    # Lane-aligned but block-ragged: multi-block, 2-core grid, fori_loop strips, and a
    # Pallas partial last block masked in-kernel (no wrapper pad at all).
    k5, k6 = jax.random.split(k4)
    x_rag = jax.random.normal(k5, (2, 3, 80, 128), dtype=jnp.float32)
    t_rag = jax.random.bernoulli(k6, p=0.4, shape=(2, 3, 80, 128)).astype(jnp.float32)
    loss_rag = dice_bce_loss(x_rag, t_rag)
    jax.block_until_ready(loss_rag)
    ref_rag = _dice_bce_ref(x_rag, t_rag)
    assert jnp.allclose(loss_rag, ref_rag, atol=1e-5, rtol=1e-5), (loss_rag, ref_rag)

    print("KERNEL_OK")
</pallas_src>

<mosaic_0001>
module attributes {stable_mosaic.version = 11 : i64} {
  func.func @_dice_bce_kernel(%arg0: i32, %arg1: i32, %arg2: memref<16x128xf32, #tpu.memory_space<vmem>>, %arg3: memref<16x128xf32, #tpu.memory_space<vmem>>, %arg4: memref<1x4xf32, #tpu.memory_space<smem>>, %arg5: memref<4x8x128xf32, #tpu.memory_space<vmem>>) attributes {dimension_semantics = [#tpu.dimension_semantics<parallel>, #tpu.dimension_semantics<arbitrary>], iteration_bounds = array<i64: 1, 1>, scalar_prefetch = 0 : i64, scratch_operands = 1 : i64, tpu.core_type = #tpu.core_type<tc>, window_params = [{transform_indices = @transform_0, window_bounds = array<i64: 16, 128>}, {transform_indices = @transform_1, window_bounds = array<i64: 16, 128>}, {transform_indices = @transform_2, window_bounds = array<i64: 1, 4>}]} {
    %c0_i32 = arith.constant 0 : i32
    %0 = arith.cmpi eq, %arg1, %c0_i32 : i32
    %1 = arith.extui %0 : i1 to i32
    %c0_i32_0 = arith.constant 0 : i32
    %2 = arith.cmpi ne, %1, %c0_i32_0 : i32
    scf.if %2 {
      %cst_35 = arith.constant 0.000000e+00 : f32
      %57 = vector.broadcast %cst_35 : f32 to vector<4x8x128xf32>
      %c0_36 = arith.constant 0 : index
      %c0_37 = arith.constant 0 : index
      %c0_38 = arith.constant 0 : index
      %58 = vector.load %arg5[%c0_36, %c0_37, %c0_38] : memref<4x8x128xf32, #tpu.memory_space<vmem>>, vector<4x8x128xf32>
      tpu.vector_store %arg5[%c0_36, %c0_37, %c0_38], %57 {strides = array<i32>} : memref<4x8x128xf32, #tpu.memory_space<vmem>>, vector<4x8x128xf32>,
    } else {
    }
    %cst = arith.constant 0.000000e+00 : f32
    %3 = vector.broadcast %cst : f32 to vector<8x128xf32>
    %c0 = arith.constant 0 : index
    %c0_1 = arith.constant 0 : index
    %4 = vector.load %arg2[%c0, %c0_1] : memref<16x128xf32, #tpu.memory_space<vmem>>, vector<16x128xf32>
    %c0_2 = arith.constant 0 : index
    %c0_3 = arith.constant 0 : index
    %5 = vector.load %arg3[%c0_2, %c0_3] : memref<16x128xf32, #tpu.memory_space<vmem>>, vector<16x128xf32>
    %cst_4 = arith.constant 5.000000e-01 : f32
    %6 = vector.broadcast %cst_4 : f32 to vector<16x128xf32>
    %7 = arith.mulf %6, %4 : vector<16x128xf32>
    %8 = math.tanh %7 : vector<16x128xf32>
    %cst_5 = arith.constant 5.000000e-01 : f32
    %9 = vector.broadcast %cst_5 : f32 to vector<16x128xf32>
    %10 = arith.mulf %9, %8 : vector<16x128xf32>
    %cst_6 = arith.constant 5.000000e-01 : f32
    %11 = vector.broadcast %cst_6 : f32 to vector<16x128xf32>
    %12 = arith.addf %10, %11 : vector<16x128xf32>
    %cst_7 = arith.constant 0.000000e+00 : f32
    %13 = vector.broadcast %cst_7 : f32 to vector<16x128xf32>
    %14 = arith.subf %13, %12 : vector<16x128xf32>
    %15 = math.exp %14 : vector<16x128xf32>
    %16 = math.log1p %15 : vector<16x128xf32>
    %17 = arith.mulf %12, %5 : vector<16x128xf32>
    %18 = vector.shape_cast %17 : vector<16x128xf32> to vector<2x8x128xf32>
    %cst_8 = arith.constant dense<0.000000e+00> : vector<8x128xf32>
    %19 = vector.multi_reduction <add>, %18, %cst_8 [0] : vector<2x8x128xf32> to vector<8x128xf32>
    %20 = arith.addf %3, %19 : vector<8x128xf32>
    %21 = vector.shape_cast %12 : vector<16x128xf32> to vector<2x8x128xf32>
    %cst_9 = arith.constant dense<0.000000e+00> : vector<8x128xf32>
    %22 = vector.multi_reduction <add>, %21, %cst_9 [0] : vector<2x8x128xf32> to vector<8x128xf32>
    %23 = arith.addf %3, %22 : vector<8x128xf32>
    %24 = vector.shape_cast %5 : vector<16x128xf32> to vector<2x8x128xf32>
    %cst_10 = arith.constant dense<0.000000e+00> : vector<8x128xf32>
    %25 = vector.multi_reduction <add>, %24, %cst_10 [0] : vector<2x8x128xf32> to vector<8x128xf32>
    %26 = arith.addf %3, %25 : vector<8x128xf32>
    %27 = vector.shape_cast %16 : vector<16x128xf32> to vector<2x8x128xf32>
    %cst_11 = arith.constant dense<0.000000e+00> : vector<8x128xf32>
    %28 = vector.multi_reduction <add>, %27, %cst_11 [0] : vector<2x8x128xf32> to vector<8x128xf32>
    %29 = arith.addf %3, %28 : vector<8x128xf32>
    %c0_12 = arith.constant 0 : index
    %c0_13 = arith.constant 0 : index
    %c0_14 = arith.constant 0 : index
    %30 = vector.load %arg5[%c0_12, %c0_13, %c0_14] : memref<4x8x128xf32, #tpu.memory_space<vmem>>, vector<1x8x128xf32>
    %31 = vector.shape_cast %30 : vector<1x8x128xf32> to vector<8x128xf32>
    %32 = arith.addf %31, %20 : vector<8x128xf32>
    %c0_15 = arith.constant 0 : index
    %c0_16 = arith.constant 0 : index
    %c0_17 = arith.constant 0 : index
    %33 = vector.load %arg5[%c0_15, %c0_16, %c0_17] : memref<4x8x128xf32, #tpu.memory_space<vmem>>, vector<1x8x128xf32>
    %34 = vector.shape_cast %33 : vector<1x8x128xf32> to vector<8x128xf32>
    %35 = vector.shape_cast %32 : vector<8x128xf32> to vector<1x8x128xf32>
    tpu.vector_store %arg5[%c0_15, %c0_16, %c0_17], %35 {strides = array<i32>} : memref<4x8x128xf32, #tpu.memory_space<vmem>>, vector<1x8x128xf32>,
    %c1 = arith.constant 1 : index
    %c0_18 = arith.constant 0 : index
    %c0_19 = arith.constant 0 : index
    %36 = vector.load %arg5[%c1, %c0_18, %c0_19] : memref<4x8x128xf32, #tpu.memory_space<vmem>>, vector<1x8x128xf32>
    %37 = vector.shape_cast %36 : vector<1x8x128xf32> to vector<8x128xf32>
    %38 = arith.addf %37, %23 : vector<8x128xf32>
    %c1_20 = arith.constant 1 : index
    %c0_21 = arith.constant 0 : index
    %c0_22 = arith.constant 0 : index
    %39 = vector.load %arg5[%c1_20, %c0_21, %c0_22] : memref<4x8x128xf32, #tpu.memory_space<vmem>>, vector<1x8x128xf32>
    %40 = vector.shape_cast %39 : vector<1x8x128xf32> to vector<8x128xf32>
    %41 = vector.shape_cast %38 : vector<8x128xf32> to vector<1x8x128xf32>
    tpu.vector_store %arg5[%c1_20, %c0_21, %c0_22], %41 {strides = array<i32>} : memref<4x8x128xf32, #tpu.memory_space<vmem>>, vector<1x8x128xf32>,
    %c2 = arith.constant 2 : index
    %c0_23 = arith.constant 0 : index
    %c0_24 = arith.constant 0 : index
    %42 = vector.load %arg5[%c2, %c0_23, %c0_24] : memref<4x8x128xf32, #tpu.memory_space<vmem>>, vector<1x8x128xf32>
    %43 = vector.shape_cast %42 : vector<1x8x128xf32> to vector<8x128xf32>
    %44 = arith.addf %43, %26 : vector<8x128xf32>
    %c2_25 = arith.constant 2 : index
    %c0_26 = arith.constant 0 : index
    %c0_27 = arith.constant 0 : index
    %45 = vector.load %arg5[%c2_25, %c0_26, %c0_27] : memref<4x8x128xf32, #tpu.memory_space<vmem>>, vector<1x8x128xf32>
    %46 = vector.shape_cast %45 : vector<1x8x128xf32> to vector<8x128xf32>
    %47 = vector.shape_cast %44 : vector<8x128xf32> to vector<1x8x128xf32>
    tpu.vector_store %arg5[%c2_25, %c0_26, %c0_27], %47 {strides = array<i32>} : memref<4x8x128xf32, #tpu.memory_space<vmem>>, vector<1x8x128xf32>,
    %c3 = arith.constant 3 : index
    %c0_28 = arith.constant 0 : index
    %c0_29 = arith.constant 0 : index
    %48 = vector.load %arg5[%c3, %c0_28, %c0_29] : memref<4x8x128xf32, #tpu.memory_space<vmem>>, vector<1x8x128xf32>
    %49 = vector.shape_cast %48 : vector<1x8x128xf32> to vector<8x128xf32>
    %50 = arith.addf %49, %29 : vector<8x128xf32>
    %c3_30 = arith.constant 3 : index
    %c0_31 = arith.constant 0 : index
    %c0_32 = arith.constant 0 : index
    %51 = vector.load %arg5[%c3_30, %c0_31, %c0_32] : memref<4x8x128xf32, #tpu.memory_space<vmem>>, vector<1x8x128xf32>
    %52 = vector.shape_cast %51 : vector<1x8x128xf32> to vector<8x128xf32>
    %53 = vector.shape_cast %50 : vector<8x128xf32> to vector<1x8x128xf32>
    tpu.vector_store %arg5[%c3_30, %c0_31, %c0_32], %53 {strides = array<i32>} : memref<4x8x128xf32, #tpu.memory_space<vmem>>, vector<1x8x128xf32>,
    %c0_i32_33 = arith.constant 0 : i32
    %54 = arith.cmpi eq, %arg1, %c0_i32_33 : i32
    %55 = arith.extui %54 : i1 to i32
    %c0_i32_34 = arith.constant 0 : i32
    %56 = arith.cmpi ne, %55, %c0_i32_34 : i32
    scf.if %56 {
      %c0_35 = arith.constant 0 : index
      %c0_36 = arith.constant 0 : index
      %c0_37 = arith.constant 0 : index
      %57 = vector.load %arg5[%c0_35, %c0_36, %c0_37] : memref<4x8x128xf32, #tpu.memory_space<vmem>>, vector<1x8x128xf32>
      %58 = vector.shape_cast %57 : vector<1x8x128xf32> to vector<8x128xf32>
      %59 = vector.shape_cast %58 : vector<8x128xf32> to vector<1x8x128xf32>
      %cst_38 = arith.constant dense<0.000000e+00> : vector<1xf32>
      %60 = vector.multi_reduction <add>, %59, %cst_38 [1, 2] : vector<1x8x128xf32> to vector<1xf32>
      %61 = vector.shape_cast %60 : vector<1xf32> to vector<1x1x1xf32>
      %62 = vector.extract %61[0, 0, 0] : f32 from vector<1x1x1xf32>
      %c0_39 = arith.constant 0 : index
      %c0_40 = arith.constant 0 : index
      %63 = memref.load %arg4[%c0_39, %c0_40] : memref<1x4xf32, #tpu.memory_space<smem>>
      memref.store %62, %arg4[%c0_39, %c0_40] : memref<1x4xf32, #tpu.memory_space<smem>>
      %c1_41 = arith.constant 1 : index
      %c0_42 = arith.constant 0 : index
      %c0_43 = arith.constant 0 : index
      %64 = vector.load %arg5[%c1_41, %c0_42, %c0_43] : memref<4x8x128xf32, #tpu.memory_space<vmem>>, vector<1x8x128xf32>
      %65 = vector.shape_cast %64 : vector<1x8x128xf32> to vector<8x128xf32>
      %66 = vector.shape_cast %65 : vector<8x128xf32> to vector<1x8x128xf32>
      %cst_44 = arith.constant dense<0.000000e+00> : vector<1xf32>
      %67 = vector.multi_reduction <add>, %66, %cst_44 [1, 2] : vector<1x8x128xf32> to vector<1xf32>
      %68 = vector.shape_cast %67 : vector<1xf32> to vector<1x1x1xf32>
      %69 = vector.extract %68[0, 0, 0] : f32 from vector<1x1x1xf32>
      %c0_45 = arith.constant 0 : index
      %c1_46 = arith.constant 1 : index
      %70 = memref.load %arg4[%c0_45, %c1_46] : memref<1x4xf32, #tpu.memory_space<smem>>
      memref.store %69, %arg4[%c0_45, %c1_46] : memref<1x4xf32, #tpu.memory_space<smem>>
      %c2_47 = arith.constant 2 : index
      %c0_48 = arith.constant 0 : index
      %c0_49 = arith.constant 0 : index
      %71 = vector.load %arg5[%c2_47, %c0_48, %c0_49] : memref<4x8x128xf32, #tpu.memory_space<vmem>>, vector<1x8x128xf32>
      %72 = vector.shape_cast %71 : vector<1x8x128xf32> to vector<8x128xf32>
      %73 = vector.shape_cast %72 : vector<8x128xf32> to vector<1x8x128xf32>
      %cst_50 = arith.constant dense<0.000000e+00> : vector<1xf32>
      %74 = vector.multi_reduction <add>, %73, %cst_50 [1, 2] : vector<1x8x128xf32> to vector<1xf32>
      %75 = vector.shape_cast %74 : vector<1xf32> to vector<1x1x1xf32>
      %76 = vector.extract %75[0, 0, 0] : f32 from vector<1x1x1xf32>
      %c0_51 = arith.constant 0 : index
      %c2_52 = arith.constant 2 : index
      %77 = memref.load %arg4[%c0_51, %c2_52] : memref<1x4xf32, #tpu.memory_space<smem>>
      memref.store %76, %arg4[%c0_51, %c2_52] : memref<1x4xf32, #tpu.memory_space<smem>>
      %c3_53 = arith.constant 3 : index
      %c0_54 = arith.constant 0 : index
      %c0_55 = arith.constant 0 : index
      %78 = vector.load %arg5[%c3_53, %c0_54, %c0_55] : memref<4x8x128xf32, #tpu.memory_space<vmem>>, vector<1x8x128xf32>
      %79 = vector.shape_cast %78 : vector<1x8x128xf32> to vector<8x128xf32>
      %80 = vector.shape_cast %79 : vector<8x128xf32> to vector<1x8x128xf32>
      %cst_56 = arith.constant dense<0.000000e+00> : vector<1xf32>
      %81 = vector.multi_reduction <add>, %80, %cst_56 [1, 2] : vector<1x8x128xf32> to vector<1xf32>
      %82 = vector.shape_cast %81 : vector<1xf32> to vector<1x1x1xf32>
      %83 = vector.extract %82[0, 0, 0] : f32 from vector<1x1x1xf32>
      %c0_57 = arith.constant 0 : index
      %c3_58 = arith.constant 3 : index
      %84 = memref.load %arg4[%c0_57, %c3_58] : memref<1x4xf32, #tpu.memory_space<smem>>
      memref.store %83, %arg4[%c0_57, %c3_58] : memref<1x4xf32, #tpu.memory_space<smem>>
    } else {
    }
    return
  }
  func.func @transform_0(%arg0: i32, %arg1: i32) -> (i32, i32) {
    %c1_i32 = arith.constant 1 : i32
    %0 = arith.muli %arg0, %c1_i32 : i32
    %1 = arith.addi %0, %arg1 : i32
    %c0_i32 = arith.constant 0 : i32
    %2 = arith.minsi %1, %c0_i32 : i32
    %c0_i32_0 = arith.constant 0 : i32
    %c0_i32_1 = arith.constant 0 : i32
    return %2, %c0_i32_0 : i32, i32
  }
  func.func @transform_1(%arg0: i32, %arg1: i32) -> (i32, i32) {
    %c1_i32 = arith.constant 1 : i32
    %0 = arith.muli %arg0, %c1_i32 : i32
    %1 = arith.addi %0, %arg1 : i32
    %c0_i32 = arith.constant 0 : i32
    %2 = arith.minsi %1, %c0_i32 : i32
    %c0_i32_0 = arith.constant 0 : i32
    %c0_i32_1 = arith.constant 0 : i32
    return %2, %c0_i32_0 : i32, i32
  }
  func.func @transform_2(%arg0: i32, %arg1: i32) -> (i32, i32) {
    %c0_i32 = arith.constant 0 : i32
    %c0_i32_0 = arith.constant 0 : i32
    return %arg0, %c0_i32 : i32, i32
  }
}

</mosaic_0001>

<llo_original>
// kernel: dice_bce_loss.1
$region0: #{dice_bce_loss.1}
  #allocation0 [shape = 'u32[]', space=smem, size = 0x4, offset = 0x4, fixed_abs, tag = 'smem constant byte address 0x4 - core index']
  #allocation1 [shape = 'u32[144,128]{1,0:T(1,128)}', space=vmem, size = 0x12000, scoped, tag = 'internal scratch']
  #allocation2 [shape = 'f32[4,8,128]{2,1,0:T(8,128)}', space=vmem, size = 0x4000, scoped, tag = 'scratch operand']
  %s0 = inlined_call_operand.vmem [shape: f32[16,128], index: 0, kind: input, shape index: {}]
  %s1 = inlined_call_operand.vmem [shape: f32[16,128], index: 1, kind: input, shape index: {}]
  %s2 = inlined_call_operand.vmem [shape: f32[1,4], index: 2, kind: output, shape index: {}]
  %s3 = sld [smem:[#allocation0]]
  $region26: #{dice_bce_loss.1} parent=0
    _
  %s5 = ssub.s32 1, %s3
  %s6 = scalar_select 0, %s5, %s3
  $region1: #{dice_bce_loss.1} parent=0
    #allocation3 [shape = 'u8[512]{0}', space=smem, size = 0x200, scoped, tag = 'output window, operand 0, single buffered']
    #allocation4 [shape = 's32[1]{0}', space=sflag, size = 0x4, scoped, tag = 'scoped memory for dice_bce_loss.1']
    %7 = vsyncpa [#allocation4], 0
    // Predicated region
    $region2: #{dice_bce_loss.1} parent=1 // pred_check
      _
    $region3: #{dice_bce_loss.1} parent=1 // pred_check_branch
      %9 = sbr.rel (0) target = $region5
    $region4: #{dice_bce_loss.1} parent=1 // pred_region
      %s10 = sadd.s32 0, 0
      %p11 = scmp.lt.s32.totalorder %s10, 0
      %s12 = scalar_select %p11, %s10, 0
      %s13 = smul.u32 2, %s12
      %p14 = scmp.lt.s32.totalorder %s13, 1
      %s15 = scalar_select %p14, %s13, 1
      %s16 = smul.addr %s15, 8
      %s17 = scalar_lea.vmem %s0, %s16
      %s18 = sadd.s32 0, 0
      %p19 = scmp.lt.s32.totalorder %s18, 0
      %s20 = scalar_select %p19, %s18, 0
      %s21 = smul.u32 2, %s20
    $region5: #{dice_bce_loss.1} parent=1 // pred_fallthru
      _
    // Predicated region
    $region6: #{dice_bce_loss.1} parent=1 // pred_check
      _
    $region7: #{dice_bce_loss.1} parent=1 // pred_check_branch
      %23 = sbr.rel (0) target = $region9
    $region8: #{dice_bce_loss.1} parent=1 // pred_region
      %s24 = sadd.s32 0, 0
      %p25 = scmp.lt.s32.totalorder %s24, 0
      %s26 = scalar_select %p25, %s24, 0
      %s27 = smul.u32 2, %s26
      %p28 = scmp.lt.s32.totalorder %s27, 1
      %s29 = scalar_select %p28, %s27, 1
      %s30 = smul.addr %s29, 8
      %s31 = scalar_lea.vmem %s1, %s30
      %s32 = sadd.s32 0, 0
      %p33 = scmp.lt.s32.totalorder %s32, 0
      %s34 = scalar_select %p33, %s32, 0
      %s35 = smul.u32 2, %s34
    $region9: #{dice_bce_loss.1} parent=1 // pred_fallthru
      _
    %s36 = sadd.s32 0, 0
    %p37 = scmp.lt.s32.totalorder %s36, 0
    %s38 = scalar_select %p37, %s36, 0
    %s39 = smul.u32 2, %s38
    %p40 = scmp.lt.s32.totalorder %s39, 1
    %s41 = scalar_select %p40, %s39, 1
    %s42 = smul.addr %s41, 8
    %s43 = scalar_lea.vmem %s0, %s42
    %s44 = sadd.s32 0, 0
    %p45 = scmp.lt.s32.totalorder %s44, 0
    %s46 = scalar_select %p45, %s44, 0
    %s47 = smul.u32 2, %s46
    %p48 = scmp.lt.s32.totalorder %s47, 1
    %s49 = scalar_select %p48, %s47, 1
    %s50 = smul.addr %s49, 8
    %s51 = scalar_lea.vmem %s1, %s50
    %s52 = sadd.s32 0, 0
    %p53 = scmp.lt.s32.totalorder %s52, 0
    %s54 = scalar_select %p53, %s52, 0
    %s55 = smul.u32 2, %s54
    %p56 = scmp.lt.s32.totalorder %s55, 1
    %s57 = scalar_select %p56, %s55, 1
    %s58 = smul.addr %s57, 8
    %s59 = scalar_lea.vmem %s0, %s58
    %s60 = sadd.s32 0, 0
    %p61 = scmp.lt.s32.totalorder %s60, 0
    %s62 = scalar_select %p61, %s60, 0
    %s63 = smul.u32 2, %s62
    %s64 = sadd.s32 0, 0
    %p65 = scmp.lt.s32.totalorder %s64, 0
    %s66 = scalar_select %p65, %s64, 0
    %s67 = smul.u32 2, %s66
    %p68 = scmp.lt.s32.totalorder %s67, 1
    %s69 = scalar_select %p68, %s67, 1
    %s70 = smul.addr %s69, 8
    %s71 = scalar_lea.vmem %s1, %s70
    %s72 = sadd.s32 0, 0
    %p73 = scmp.lt.s32.totalorder %s72, 0
    %s74 = scalar_select %p73, %s72, 0
    %s75 = smul.u32 2, %s74
    %p76 = scmp.eq.s32.totalorder 0, 0
    // Predicated region
    $region10: #{dice_bce_loss.1} parent=1 // pred_check
      %p77 = pneg %p76
    $region11: #{dice_bce_loss.1} parent=1 // pred_check_branch
      %79 = sbr.rel (%p77) target = $region13
    $region12: #{dice_bce_loss.1} parent=1 // pred_region
      %80 = vst [vmem:[#allocation2] sm:$0xff] 0.0
      %81 = vst [vmem:[#allocation2 + $0x8] sm:$0xff] 0.0
      %82 = vst [vmem:[#allocation2 + $0x10] sm:$0xff] 0.0
      %83 = vst [vmem:[#allocation2 + $0x18] sm:$0xff] 0.0
    $region13: #{dice_bce_loss.1} parent=1 // pred_fallthru
      _
    %v84 = vld [vmem:[%s59] sm:$0xff]
    %v85 = vld [vmem:[%s59 + $0x8] sm:$0xff]
    %v86 = vld [vmem:[%s71] sm:$0xff]
    %v87 = vld [vmem:[%s71 + $0x8] sm:$0xff]
    %v88 = vmul.f32 %v84, 0.5
    %v89 = vmul.f32 %v85, 0.5
    %v90 = vtanh.pop %v88
    %v91 = vtanh.pop %v89
    %v92 = vmul.f32 %v90, 0.5
    %v93 = vmul.f32 %v91, 0.5
    %v94 = vadd.f32 %v92, 0.5
    %v95 = vadd.f32 %v93, 0.5
    %v96 = vsub.f32 0.0, %v94
    %v97 = vsub.f32 0.0, %v95
    %v98 = vmul.f32 %v96, 1.442695
    %v99 = vpow.pop %v98
    %v100 = vmul.f32 %v97, 1.442695
    %v101 = vpow.pop %v100
    %v102 = vadd.f32 %v99, 1.0
    %v103 = vlog2.pop %v102
    %v104 = vmul.f32 %v103, 0.6931472
    %v105 = vmul.f32 -0.5, %v99
    %v106 = vadd.f32 %v105, 1.0
    %v107 = vmul.f32 %v106, %v99
    %v108 = vand.u32 2147483647, %v99
    %vm109 = vcmp.lt.f32.partialorder %v108, 0.0004427343
    %v110 = vsel %vm109, %v107, %v104
    %v111 = vadd.f32 %v101, 1.0
    %v112 = vlog2.pop %v111
    %v113 = vmul.f32 %v112, 0.6931472
    %v114 = vmul.f32 -0.5, %v101
    %v115 = vadd.f32 %v114, 1.0
    %v116 = vmul.f32 %v115, %v101
    %v117 = vand.u32 2147483647, %v101
    %vm118 = vcmp.lt.f32.partialorder %v117, 0.0004427343
    %v119 = vsel %vm118, %v116, %v113
    %v120 = vmul.f32 %v94, %v86
    %v121 = vmul.f32 %v95, %v87
    %v122 = vadd.f32 %v120, %v121
    %v123 = vadd.f32 %v122, 0.0
    %v124 = vadd.f32 %v94, %v95
    %v125 = vadd.f32 %v124, 0.0
    %v126 = vadd.f32 %v86, %v87
    %v127 = vadd.f32 %v126, 0.0
    %v128 = vadd.f32 %v110, %v119
    %v129 = vadd.f32 %v128, 0.0
    %v130 = vld [vmem:[#allocation2] sm:$0xff]
    %v131 = vadd.f32 %v130, %v123
    %132 = vst [vmem:[#allocation2] sm:$0xff] %v131
    %s133 = scalar_lea.vmem [#allocation2], 8
    %v134 = vld [vmem:[%s133] sm:$0xff]
    %v135 = vadd.f32 %v134, %v125
    %136 = vst [vmem:[%s133] sm:$0xff] %v135
    %s137 = scalar_lea.vmem [#allocation2], 16
    %v138 = vld [vmem:[%s137] sm:$0xff]
    %v139 = vadd.f32 %v138, %v127
    %140 = vst [vmem:[%s137] sm:$0xff] %v139
    %s141 = scalar_lea.vmem [#allocation2], 24
    %v142 = vld [vmem:[%s141] sm:$0xff]
    %v143 = vadd.f32 %v142, %v129
    %144 = vst [vmem:[%s141] sm:$0xff] %v143
    // Predicated region
    $region14: #{dice_bce_loss.1} parent=1 // pred_check
      %p145 = pneg %p76
    $region15: #{dice_bce_loss.1} parent=1 // pred_check_branch
      %147 = sbr.rel (%p145) target = $region17
    $region16: #{dice_bce_loss.1} parent=1 // pred_region
      %v148 = vld [vmem:[#allocation2] sm:$0xff]
      %149 = vadd.xlane.f32.xlu0 %v148
      %v150 = vpop.xlane.xlu0 %149
      %v151 = vrot.slane %v150, 4
      %v152 = vadd.f32 %v150, %v151
      %v153 = vrot.slane %v152, 2
      %v154 = vadd.f32 %v152, %v153
      %v155 = vrot.slane %v154, 1
      %v156 = vadd.f32 %v154, %v155
      %s157 = vtos %v156
      %s158 = scalar_lea.smem [#allocation3], 0
      %159 = sst [smem:[%s158]] %s157
      %v160 = vld [vmem:[%s133] sm:$0xff]
      %161 = vadd.xlane.f32.xlu0 %v160
      %v162 = vpop.xlane.xlu0 %161
      %v163 = vrot.slane %v162, 4
      %v164 = vadd.f32 %v162, %v163
      %v165 = vrot.slane %v164, 2
      %v166 = vadd.f32 %v164, %v165
      %v167 = vrot.slane %v166, 1
      %v168 = vadd.f32 %v166, %v167
      %s169 = vtos %v168
      %s170 = scalar_lea.smem [#allocation3], 1
      %171 = sst [smem:[%s170]] %s169
      %v172 = vld [vmem:[%s137] sm:$0xff]
      %173 = vadd.xlane.f32.xlu0 %v172
      %v174 = vpop.xlane.xlu0 %173
      %v175 = vrot.slane %v174, 4
      %v176 = vadd.f32 %v174, %v175
      %v177 = vrot.slane %v176, 2
      %v178 = vadd.f32 %v176, %v177
      %v179 = vrot.slane %v178, 1
      %v180 = vadd.f32 %v178, %v179
      %s181 = vtos %v180
      %s182 = scalar_lea.smem [#allocation3], 2
      %183 = sst [smem:[%s182]] %s181
      %v184 = vld [vmem:[%s141] sm:$0xff]
      %185 = vadd.xlane.f32.xlu0 %v184
      %v186 = vpop.xlane.xlu0 %185
      %v187 = vrot.slane %v186, 4
      %v188 = vadd.f32 %v186, %v187
      %v189 = vrot.slane %v188, 2
      %v190 = vadd.f32 %v188, %v189
      %v191 = vrot.slane %v190, 1
      %v192 = vadd.f32 %v190, %v191
      %s193 = vtos %v192
      %s194 = scalar_lea.smem [#allocation3], 3
      %195 = sst [smem:[%s194]] %s193
    $region17: #{dice_bce_loss.1} parent=1 // pred_fallthru
      _
    // Predicated region
    $region18: #{dice_bce_loss.1} parent=1 // pred_check
      _
    $region19: #{dice_bce_loss.1} parent=1 // pred_check_branch
      %197 = sbr.rel (0) target = $region21
    $region20: #{dice_bce_loss.1} parent=1 // pred_region
      %s199 = ssub.s32 16, 16
      %200 = vsyncadd [#allocation4], %s199
      %s202 = sshll.u32 %s2, 4
      %s203 = int_to_ptr.vmem [resolvable:$true] %s202
      %205 = dma.smem_to_vmem [#allocation3], 16, %s203, [#allocation4]
    $region21: #{dice_bce_loss.1} parent=1 // pred_fallthru
      _
    // Predicated region
    $region22: #{dice_bce_loss.1} parent=1 // pred_check
      _
    $region23: #{dice_bce_loss.1} parent=1 // pred_check_branch
      %207 = sbr.rel (0) target = $region25
    $region24: #{dice_bce_loss.1} parent=1 // pred_region
      %208 = dma.done [#allocation4], 16
    $region25: #{dice_bce_loss.1} parent=1 // pred_fallthru
      _
    %209 = sfence
    %210 = vsyncpa [#allocation4], 1

</llo_original>
